<compile_context>
chip_gen: v5e
topology: v5e:2x2
jax: 0.10.0
libtpu: 0.0.40
codegen_flags: <defaults>
</compile_context>

<pallas_src>
import functools

import jax
import jax.numpy as jnp
from jax.experimental import pallas as pl
from jax.experimental.pallas import tpu as pltpu


def _round_up(x, m):
    return ((x + m - 1) // m) * m


# ---------------------------------------------------------------------------
# Kernel: fused fc1 -> ReLU -> fc2 -> ReLU -> out for one batch tile.
# ---------------------------------------------------------------------------
def _decoder_kernel(z_ref, w1_ref, b1_ref, w2_ref, b2_ref, w3_ref, b3_ref,
                    out_ref):
    # z arrives as f32 with its true (unpadded) feature dim; the bf16 cast for
    # the MXU happens here (fused, per tile) instead of as a separate XLA op.
    z = z_ref[...].astype(jnp.bfloat16)
    # fc1 + ReLU  (bf16 MXU inputs, f32 accumulation / bias / activation)
    h1 = jnp.dot(z, w1_ref[...], preferred_element_type=jnp.float32)
    h1 = jnp.maximum(h1 + b1_ref[...], 0.0).astype(jnp.bfloat16)
    # fc2 + ReLU
    h2 = jnp.dot(h1, w2_ref[...], preferred_element_type=jnp.float32)
    h2 = jnp.maximum(h2 + b2_ref[...], 0.0).astype(jnp.bfloat16)
    # out (no activation — matches the PyTorch forward)
    recon = jnp.dot(h2, w3_ref[...], preferred_element_type=jnp.float32)
    out_ref[...] = (recon + b3_ref[...]).astype(out_ref.dtype)


# ---------------------------------------------------------------------------
# One-time parameter preparation (hoisted out of the per-call path).
# ---------------------------------------------------------------------------
def prepare_decoder_params(params):
    """PyTorch nn.Linear weights are [out, in]; transpose to [in, out].

    Hidden / output feature dims are zero-padded to multiples of 128 so the
    MXU N dims and all vector stores are lane-dense.  fc1's K dim is kept at
    the raw z_dim because z is streamed unpadded.  Zero padding is
    semantics-preserving: padded hidden columns are ReLU(0 + 0) = 0 and
    multiply zero weight rows in the next layer; padded output columns are
    sliced off by the wrapper.  Weights are cast to bf16 once here.
    """
    def prep(w, b, pad_in):
        out_f, in_f = w.shape
        in_p = _round_up(in_f, 128) if pad_in else in_f
        out_p = _round_up(out_f, 128)
        w_t = jnp.zeros((in_p, out_p), jnp.float32).at[:in_f, :out_f].set(w.T)
        b_p = jnp.zeros((1, out_p), jnp.float32).at[0, :out_f].set(b)
        return w_t.astype(jnp.bfloat16), b_p

    w1, b1 = prep(params["fc1_w"], params["fc1_b"], pad_in=False)
    w2, b2 = prep(params["fc2_w"], params["fc2_b"], pad_in=True)
    w3, b3 = prep(params["out_w"], params["out_b"], pad_in=True)
    return (w1, b1, w2, b2, w3, b3)


# ---------------------------------------------------------------------------
# Tile selection: big tiles (HBM roofline), >= 2 grid steps for v7x dual-TC,
# shrink if the VMEM estimate exceeds a v7x-safe budget.
# ---------------------------------------------------------------------------
_TILE_B_CAP = 1024             # 512-1024 reaches ~85% of HBM roofline
_TILE_VMEM_BUDGET = 40 << 20   # stay well under v7x's 64 MiB physical VMEM/TC


def _vmem_estimate(tile_b, z_dim, h1_pad, h2_pad, out_pad, resident_bytes):
    stream = 2 * tile_b * (z_dim + out_pad) * 4            # dbl-buffered z/out
    temps = (tile_b * (h1_pad + h2_pad + out_pad) * 4      # f32 temporaries
             + tile_b * (z_dim + h1_pad + h2_pad) * 2)     # bf16 temporaries
    return stream + 2 * resident_bytes + temps


def _choose_tile_b(B, z_dim, h1_pad, h2_pad, out_pad, resident_bytes):
    if B <= 16:
        tile_b = max(8, _round_up(B, 8))                   # single tile
    else:
        # At least two grid steps so the "parallel" batch axis can shard
        # across v7x's two TensorCores; the cap keeps per-step DMAs large.
        tile_b = min(_TILE_B_CAP, _round_up((B + 1) // 2, 8))
    while (tile_b > 8 and
           _vmem_estimate(tile_b, z_dim, h1_pad, h2_pad, out_pad,
                          resident_bytes) > _TILE_VMEM_BUDGET):
        tile_b = max(8, _round_up(tile_b // 2, 8))
    return tile_b


# ---------------------------------------------------------------------------
# Forward
# ---------------------------------------------------------------------------
@functools.partial(jax.jit, static_argnames=("input_dim", "z_dim"))
def decoder_forward(z, prepped, *, input_dim, z_dim):
    """z: [B, z_dim] f32. prepped: output of prepare_decoder_params."""
    w1, b1, w2, b2, w3, b3 = prepped
    B = z.shape[0]
    assert z.shape[1] == z_dim
    _, h1_pad = w1.shape
    _, h2_pad = w2.shape
    _, out_pad = w3.shape

    resident_bytes = ((w1.size + w2.size + w3.size) * 2 +
                      (b1.size + b2.size + b3.size) * 4)
    tile_b = _choose_tile_b(B, z_dim, h1_pad, h2_pad, out_pad, resident_bytes)
    b_pad = _round_up(B, tile_b)

    # Pad the batch only when the tile does not divide it.  Padded rows hold
    # bias-only values inside the kernel and are sliced off below.
    z_in = z if b_pad == B else jnp.pad(z, ((0, b_pad - B), (0, 0)))

    est = _vmem_estimate(tile_b, z_dim, h1_pad, h2_pad, out_pad, resident_bytes)
    vmem_limit = int(min(64 << 20, max(32 << 20, 2 * est)))

    grid = (b_pad // tile_b,)
    out_padded = pl.pallas_call(
        _decoder_kernel,
        out_shape=jax.ShapeDtypeStruct((b_pad, out_pad), jnp.float32),
        grid=grid,
        in_specs=[
            # Streaming batch tile of z, full (unpadded) feature dim.
            pl.BlockSpec((tile_b, z_dim), lambda i: (i, 0)),
            # Weights / biases: constant index_map -> fetched once, VMEM
            # resident across all grid steps.
            pl.BlockSpec((z_dim, h1_pad), lambda i: (0, 0)),
            pl.BlockSpec((1, h1_pad), lambda i: (0, 0)),
            pl.BlockSpec((h1_pad, h2_pad), lambda i: (0, 0)),
            pl.BlockSpec((1, h2_pad), lambda i: (0, 0)),
            pl.BlockSpec((h2_pad, out_pad), lambda i: (0, 0)),
            pl.BlockSpec((1, out_pad), lambda i: (0, 0)),
        ],
        out_specs=pl.BlockSpec((tile_b, out_pad), lambda i: (i, 0)),
        compiler_params=pltpu.CompilerParams(
            dimension_semantics=("parallel",),
            vmem_limit_bytes=vmem_limit),
    )(z_in, w1, b1, w2, b2, w3, b3)

    # Strip batch / feature padding only when it actually exists (avoids an
    # extra full-output HBM copy for aligned shapes).
    if b_pad != B or out_pad != input_dim:
        out_padded = out_padded[:B, :input_dim]
    return out_padded


# ---------------------------------------------------------------------------
# Init + references
# ---------------------------------------------------------------------------
def init_decoder_params(key, input_dim, z_dim, h_dim1, h_dim2):
    """Deterministic init mimicking nn.Linear's uniform(-1/sqrt(in), 1/sqrt(in))."""
    def linear_init(k, out_f, in_f):
        kw, kb = jax.random.split(k)
        bound = 1.0 / jnp.sqrt(jnp.float32(in_f))
        w = jax.random.uniform(kw, (out_f, in_f), jnp.float32, -bound, bound)
        b = jax.random.uniform(kb, (out_f,), jnp.float32, -bound, bound)
        return w, b

    k1, k2, k3 = jax.random.split(key, 3)
    fc1_w, fc1_b = linear_init(k1, h_dim1, z_dim)
    fc2_w, fc2_b = linear_init(k2, h_dim2, h_dim1)
    out_w, out_b = linear_init(k3, input_dim, h_dim2)
    return {
        "fc1_w": fc1_w, "fc1_b": fc1_b,
        "fc2_w": fc2_w, "fc2_b": fc2_b,
        "out_w": out_w, "out_b": out_b,
    }


def decoder_reference_f32(z, params):
    """Pure-JAX f32 reference matching the PyTorch forward exactly."""
    h1 = jnp.maximum(z @ params["fc1_w"].T + params["fc1_b"], 0.0)
    h2 = jnp.maximum(h1 @ params["fc2_w"].T + params["fc2_b"], 0.0)
    return h2 @ params["out_w"].T + params["out_b"]


def decoder_reference_bf16(z, params):
    """Reference with the same bf16-input / f32-accumulate scheme as the kernel."""
    def lin(x, w, b):
        return jnp.dot(x.astype(jnp.bfloat16), w.T.astype(jnp.bfloat16),
                       preferred_element_type=jnp.float32) + b
    h1 = jnp.maximum(lin(z, params["fc1_w"], params["fc1_b"]), 0.0)
    h2 = jnp.maximum(lin(h1, params["fc2_w"], params["fc2_b"]), 0.0)
    return lin(h2, params["out_w"], params["out_b"])


if __name__ == "__main__":
    # Small shapes consistent with the module's forward: z is [batch, z_dim].
    batch, z_dim, h_dim1, h_dim2, input_dim = 8, 16, 32, 32, 64

    key = jax.random.PRNGKey(0)
    kp, kz = jax.random.split(key)
    params = init_decoder_params(kp, input_dim, z_dim, h_dim1, h_dim2)
    z = jax.random.normal(kz, (batch, z_dim), jnp.float32)

    prepped = prepare_decoder_params(params)
    recon = decoder_forward(z, prepped, input_dim=input_dim, z_dim=z_dim)
    recon = jax.block_until_ready(recon)

    assert recon.shape == (batch, input_dim)

    # Tight check against a reference using the same bf16-MXU / f32-acc scheme.
    ref_bf16 = decoder_reference_bf16(z, params)
    assert jnp.allclose(recon, ref_bf16, atol=2e-3, rtol=2e-3), \
        "mismatch vs bf16-emulated reference"

    # Loose check against the pure-f32 PyTorch-equivalent reference
    # (bf16 MXU inputs introduce ~0.4% relative error per layer — deliberate).
    ref_f32 = decoder_reference_f32(z, params)
    assert jnp.allclose(recon, ref_f32, atol=5e-2, rtol=5e-2), \
        "mismatch vs f32 reference"

    print("KERNEL_OK")
</pallas_src>

<mosaic_0001>
module attributes {stable_mosaic.version = 11 : i64} {
  func.func @_decoder_kernel(%arg0: i32, %arg1: memref<8x16xf32, #tpu.memory_space<vmem>>, %arg2: memref<16x128xbf16, #tpu.memory_space<vmem>>, %arg3: memref<1x128xf32, #tpu.memory_space<vmem>>, %arg4: memref<128x128xbf16, #tpu.memory_space<vmem>>, %arg5: memref<1x128xf32, #tpu.memory_space<vmem>>, %arg6: memref<128x128xbf16, #tpu.memory_space<vmem>>, %arg7: memref<1x128xf32, #tpu.memory_space<vmem>>, %arg8: memref<8x128xf32, #tpu.memory_space<vmem>>) attributes {dimension_semantics = [#tpu.dimension_semantics<parallel>], iteration_bounds = array<i64: 1>, scalar_prefetch = 0 : i64, scratch_operands = 0 : i64, tpu.core_type = #tpu.core_type<tc>, window_params = [{transform_indices = @transform_0, window_bounds = array<i64: 8, 16>}, {pipeline_mode = #tpu.pipeline_mode<synchronous>, transform_indices = @transform_1, window_bounds = array<i64: 16, 128>}, {pipeline_mode = #tpu.pipeline_mode<synchronous>, transform_indices = @transform_2, window_bounds = array<i64: 1, 128>}, {pipeline_mode = #tpu.pipeline_mode<synchronous>, transform_indices = @transform_3, window_bounds = array<i64: 128, 128>}, {pipeline_mode = #tpu.pipeline_mode<synchronous>, transform_indices = @transform_4, window_bounds = array<i64: 1, 128>}, {pipeline_mode = #tpu.pipeline_mode<synchronous>, transform_indices = @transform_5, window_bounds = array<i64: 128, 128>}, {pipeline_mode = #tpu.pipeline_mode<synchronous>, transform_indices = @transform_6, window_bounds = array<i64: 1, 128>}, {transform_indices = @transform_7, window_bounds = array<i64: 8, 128>}]} {
    %c0 = arith.constant 0 : index
    %c0_0 = arith.constant 0 : index
    %0 = vector.load %arg1[%c0, %c0_0] : memref<8x16xf32, #tpu.memory_space<vmem>>, vector<8x16xf32>
    %1 = arith.truncf %0 : vector<8x16xf32> to vector<8x16xbf16>
    %c0_1 = arith.constant 0 : index
    %c0_2 = arith.constant 0 : index
    %2 = vector.load %arg2[%c0_1, %c0_2] : memref<16x128xbf16, #tpu.memory_space<vmem>>, vector<16x128xbf16>
    %cst = arith.constant dense<0.000000e+00> : vector<8x128xf32>
    %3 = tpu.matmul %1, %2, %cst {dimension_numbers = #tpu.dot_dimension_numbers<[1], [0], [0], [1], [0, 0, 1, 1], [], []>} : vector<8x16xbf16>, vector<16x128xbf16>, vector<8x128xf32> -> vector<8x128xf32>
    %c0_3 = arith.constant 0 : index
    %c0_4 = arith.constant 0 : index
    %4 = vector.load %arg3[%c0_3, %c0_4] : memref<1x128xf32, #tpu.memory_space<vmem>>, vector<1x128xf32>
    %5 = vector.broadcast %4 : vector<1x128xf32> to vector<8x128xf32>
    %6 = arith.addf %3, %5 : vector<8x128xf32>
    %cst_5 = arith.constant 0.000000e+00 : f32
    %7 = vector.broadcast %cst_5 : f32 to vector<8x128xf32>
    %8 = arith.maximumf %6, %7 : vector<8x128xf32>
    %9 = arith.truncf %8 : vector<8x128xf32> to vector<8x128xbf16>
    %c0_6 = arith.constant 0 : index
    %c0_7 = arith.constant 0 : index
    %10 = vector.load %arg4[%c0_6, %c0_7] : memref<128x128xbf16, #tpu.memory_space<vmem>>, vector<128x128xbf16>
    %cst_8 = arith.constant dense<0.000000e+00> : vector<8x128xf32>
    %11 = tpu.matmul %9, %10, %cst_8 {dimension_numbers = #tpu.dot_dimension_numbers<[1], [0], [0], [1], [0, 0, 1, 1], [], []>} : vector<8x128xbf16>, vector<128x128xbf16>, vector<8x128xf32> -> vector<8x128xf32>
    %c0_9 = arith.constant 0 : index
    %c0_10 = arith.constant 0 : index
    %12 = vector.load %arg5[%c0_9, %c0_10] : memref<1x128xf32, #tpu.memory_space<vmem>>, vector<1x128xf32>
    %13 = vector.broadcast %12 : vector<1x128xf32> to vector<8x128xf32>
    %14 = arith.addf %11, %13 : vector<8x128xf32>
    %cst_11 = arith.constant 0.000000e+00 : f32
    %15 = vector.broadcast %cst_11 : f32 to vector<8x128xf32>
    %16 = arith.maximumf %14, %15 : vector<8x128xf32>
    %17 = arith.truncf %16 : vector<8x128xf32> to vector<8x128xbf16>
    %c0_12 = arith.constant 0 : index
    %c0_13 = arith.constant 0 : index
    %18 = vector.load %arg6[%c0_12, %c0_13] : memref<128x128xbf16, #tpu.memory_space<vmem>>, vector<128x128xbf16>
    %cst_14 = arith.constant dense<0.000000e+00> : vector<8x128xf32>
    %19 = tpu.matmul %17, %18, %cst_14 {dimension_numbers = #tpu.dot_dimension_numbers<[1], [0], [0], [1], [0, 0, 1, 1], [], []>} : vector<8x128xbf16>, vector<128x128xbf16>, vector<8x128xf32> -> vector<8x128xf32>
    %c0_15 = arith.constant 0 : index
    %c0_16 = arith.constant 0 : index
    %20 = vector.load %arg7[%c0_15, %c0_16] : memref<1x128xf32, #tpu.memory_space<vmem>>, vector<1x128xf32>
    %21 = vector.broadcast %20 : vector<1x128xf32> to vector<8x128xf32>
    %22 = arith.addf %19, %21 : vector<8x128xf32>
    %c0_17 = arith.constant 0 : index
    %c0_18 = arith.constant 0 : index
    %23 = vector.load %arg8[%c0_17, %c0_18] : memref<8x128xf32, #tpu.memory_space<vmem>>, vector<8x128xf32>
    tpu.vector_store %arg8[%c0_17, %c0_18], %22 {strides = array<i32>} : memref<8x128xf32, #tpu.memory_space<vmem>>, vector<8x128xf32>,
    return
  }
  func.func @transform_0(%arg0: i32) -> (i32, i32) {
    %c0_i32 = arith.constant 0 : i32
    %c0_i32_0 = arith.constant 0 : i32
    return %arg0, %c0_i32 : i32, i32
  }
  func.func @transform_1(%arg0: i32) -> (i32, i32) {
    %c0_i32 = arith.constant 0 : i32
    %c0_i32_0 = arith.constant 0 : i32
    %c0_i32_1 = arith.constant 0 : i32
    return %c0_i32, %c0_i32_0 : i32, i32
  }
  func.func @transform_2(%arg0: i32) -> (i32, i32) {
    %c0_i32 = arith.constant 0 : i32
    %c0_i32_0 = arith.constant 0 : i32
    %c0_i32_1 = arith.constant 0 : i32
    return %c0_i32, %c0_i32_0 : i32, i32
  }
  func.func @transform_3(%arg0: i32) -> (i32, i32) {
    %c0_i32 = arith.constant 0 : i32
    %c0_i32_0 = arith.constant 0 : i32
    %c0_i32_1 = arith.constant 0 : i32
    return %c0_i32, %c0_i32_0 : i32, i32
  }
  func.func @transform_4(%arg0: i32) -> (i32, i32) {
    %c0_i32 = arith.constant 0 : i32
    %c0_i32_0 = arith.constant 0 : i32
    %c0_i32_1 = arith.constant 0 : i32
    return %c0_i32, %c0_i32_0 : i32, i32
  }
  func.func @transform_5(%arg0: i32) -> (i32, i32) {
    %c0_i32 = arith.constant 0 : i32
    %c0_i32_0 = arith.constant 0 : i32
    %c0_i32_1 = arith.constant 0 : i32
    return %c0_i32, %c0_i32_0 : i32, i32
  }
  func.func @transform_6(%arg0: i32) -> (i32, i32) {
    %c0_i32 = arith.constant 0 : i32
    %c0_i32_0 = arith.constant 0 : i32
    %c0_i32_1 = arith.constant 0 : i32
    return %c0_i32, %c0_i32_0 : i32, i32
  }
  func.func @transform_7(%arg0: i32) -> (i32, i32) {
    %c0_i32 = arith.constant 0 : i32
    %c0_i32_0 = arith.constant 0 : i32
    return %arg0, %c0_i32 : i32, i32
  }
}

</mosaic_0001>

<llo_original>
// kernel: decoder_forward.1
$region0: #{decoder_forward.1}
  #allocation0 [shape = 'u32[]', space=smem, size = 0x4, offset = 0x4, fixed_abs, tag = 'smem constant byte address 0x4 - core index']
  #allocation1 [shape = 'u32[72,128]{1,0:T(1,128)}', space=vmem, size = 0x9000, scoped, tag = 'internal scratch']
  %s0 = inlined_call_operand.hbm [shape: f32[8,16], index: 0, kind: input, shape index: {}]
  %s1 = inlined_call_operand.hbm [shape: bf16[16,128], index: 1, kind: input, shape index: {}]
  %s2 = inlined_call_operand.vmem [shape: f32[1,128], index: 2, kind: input, shape index: {}]
  %s3 = inlined_call_operand.hbm [shape: bf16[128,128], index: 3, kind: input, shape index: {}]
  %s4 = inlined_call_operand.vmem [shape: f32[1,128], index: 4, kind: input, shape index: {}]
  %s5 = inlined_call_operand.hbm [shape: bf16[128,128], index: 5, kind: input, shape index: {}]
  %s6 = inlined_call_operand.vmem [shape: f32[1,128], index: 6, kind: input, shape index: {}]
  %s7 = inlined_call_operand.hbm [shape: f32[8,128], index: 7, kind: output, shape index: {}]
  %s8 = sld [smem:[#allocation0]]
  $region54: #{decoder_forward.1} parent=0
    _
  %s10 = ssub.s32 1, %s8
  %s11 = scalar_select 0, %s10, %s8
  $region1: #{decoder_forward.1} parent=0
    #allocation2 [shape = 'u8[4096]{0}', space=vmem, size = 0x1000, scoped, tag = 'input window, operand 0, single buffered']
    #allocation3 [shape = 's32[1]{0}', space=sflag, size = 0x4, scoped, tag = 'scoped memory for decoder_forward.1']
    #allocation4 [shape = 's32[1]{0}', space=sflag, size = 0x4, scoped, tag = 'scoped memory for decoder_forward.1']
    #allocation5 [shape = 'u8[4096]{0}', space=vmem, size = 0x1000, scoped, tag = 'input window, operand 1, single buffered']
    #allocation6 [shape = 's32[1]{0}', space=sflag, size = 0x4, scoped, tag = 'scoped memory for decoder_forward.1']
    #allocation7 [shape = 'u8[32768]{0}', space=vmem, size = 0x8000, scoped, tag = 'input window, operand 3, single buffered']
    #allocation8 [shape = 'u8[32768]{0}', space=vmem, size = 0x8000, scoped, tag = 'input window, operand 5, single buffered']
    #allocation9 [shape = 's32[1]{0}', space=sflag, size = 0x4, scoped, tag = 'scoped memory for decoder_forward.1']
    #allocation10 [shape = 'u8[4096]{0}', space=vmem, size = 0x1000, scoped, tag = 'output window, operand 0, single buffered']
    %12 = vsyncpa [#allocation3], 0
    %13 = vsyncpa [#allocation6], 0
    %14 = vsyncpa [#allocation9], 0
    %15 = vsyncpa [#allocation4], 0
    // Predicated region
    $region2: #{decoder_forward.1} parent=1 // pred_check
      _
    $region3: #{decoder_forward.1} parent=1 // pred_check_branch
      %17 = sbr.rel (0) target = $region5
    $region4: #{decoder_forward.1} parent=1 // pred_region
      %19 = vsyncadd [#allocation3], 0
      %s21 = sshll.u32 %s0, 4
      %s22 = int_to_ptr.hbm [resolvable:$true] %s21
      %s23 = sshll.u32 [#allocation2], 4
      %s24 = int_to_ptr.vmem [resolvable:$true] %s23
      %26 = dma.hbm_to_vmem [thread:$0]  %s22, 128, %s24, [#allocation3]
    $region5: #{decoder_forward.1} parent=1 // pred_fallthru
      _
    // Predicated region
    $region6: #{decoder_forward.1} parent=1 // pred_check
      _
    $region7: #{decoder_forward.1} parent=1 // pred_check_branch
      %28 = sbr.rel (0) target = $region9
    $region8: #{decoder_forward.1} parent=1 // pred_region
      %30 = vsyncadd [#allocation6], 0
      %s31 = sshll.u32 %s1, 4
      %s32 = int_to_ptr.hbm [resolvable:$true] %s31
      %s33 = sshll.u32 [#allocation5], 4
      %s34 = int_to_ptr.vmem [resolvable:$true] %s33
      %39 = dma.hbm_to_vmem [thread:$0]  %s32, 128, %s34, [#allocation6], 64, 64, 4
    $region9: #{decoder_forward.1} parent=1 // pred_fallthru
      _
    // Predicated region
    $region10: #{decoder_forward.1} parent=1 // pred_check
      _
    $region11: #{decoder_forward.1} parent=1 // pred_check_branch
      %41 = sbr.rel (0) target = $region13
    $region12: #{decoder_forward.1} parent=1 // pred_region
      _
    $region13: #{decoder_forward.1} parent=1 // pred_fallthru
      _
    // Predicated region
    $region14: #{decoder_forward.1} parent=1 // pred_check
      _
    $region15: #{decoder_forward.1} parent=1 // pred_check_branch
      %43 = sbr.rel (0) target = $region17
    $region16: #{decoder_forward.1} parent=1 // pred_region
      %45 = vsyncadd [#allocation6], 0
      %s46 = sshll.u32 %s3, 4
      %s47 = int_to_ptr.hbm [resolvable:$true] %s46
      %s48 = sshll.u32 [#allocation7], 4
      %s49 = int_to_ptr.vmem [resolvable:$true] %s48
      %54 = dma.hbm_to_vmem [thread:$0]  %s47, 1024, %s49, [#allocation6], 64, 64, 4
    $region17: #{decoder_forward.1} parent=1 // pred_fallthru
      _
    // Predicated region
    $region18: #{decoder_forward.1} parent=1 // pred_check
      _
    $region19: #{decoder_forward.1} parent=1 // pred_check_branch
      %56 = sbr.rel (0) target = $region21
    $region20: #{decoder_forward.1} parent=1 // pred_region
      _
    $region21: #{decoder_forward.1} parent=1 // pred_fallthru
      _
    // Predicated region
    $region22: #{decoder_forward.1} parent=1 // pred_check
      _
    $region23: #{decoder_forward.1} parent=1 // pred_check_branch
      %58 = sbr.rel (0) target = $region25
    $region24: #{decoder_forward.1} parent=1 // pred_region
      %60 = vsyncadd [#allocation9], 0
      %s61 = sshll.u32 %s5, 4
      %s62 = int_to_ptr.hbm [resolvable:$true] %s61
      %s63 = sshll.u32 [#allocation8], 4
      %s64 = int_to_ptr.vmem [resolvable:$true] %s63
      %69 = dma.hbm_to_vmem [thread:$0]  %s62, 1024, %s64, [#allocation9], 64, 64, 4
    $region25: #{decoder_forward.1} parent=1 // pred_fallthru
      _
    // Predicated region
    $region26: #{decoder_forward.1} parent=1 // pred_check
      _
    $region27: #{decoder_forward.1} parent=1 // pred_check_branch
      %71 = sbr.rel (0) target = $region29
    $region28: #{decoder_forward.1} parent=1 // pred_region
      _
    $region29: #{decoder_forward.1} parent=1 // pred_fallthru
      _
    // Predicated region
    $region30: #{decoder_forward.1} parent=1 // pred_check
      _
    $region31: #{decoder_forward.1} parent=1 // pred_check_branch
      %73 = sbr.rel (0) target = $region33
    $region32: #{decoder_forward.1} parent=1 // pred_region
      %75 = dma.done [#allocation3], 128
    $region33: #{decoder_forward.1} parent=1 // pred_fallthru
      _
    // Predicated region
    $region34: #{decoder_forward.1} parent=1 // pred_check
      _
    $region35: #{decoder_forward.1} parent=1 // pred_check_branch
      %77 = sbr.rel (0) target = $region37
    $region36: #{decoder_forward.1} parent=1 // pred_region
      %79 = dma.done [#allocation6], 128
    $region37: #{decoder_forward.1} parent=1 // pred_fallthru
      _
    // Predicated region
    $region38: #{decoder_forward.1} parent=1 // pred_check
      _
    $region39: #{decoder_forward.1} parent=1 // pred_check_branch
      %81 = sbr.rel (0) target = $region41
    $region40: #{decoder_forward.1} parent=1 // pred_region
      %83 = dma.done [#allocation6], 1024
    $region41: #{decoder_forward.1} parent=1 // pred_fallthru
      _
    // Predicated region
    $region42: #{decoder_forward.1} parent=1 // pred_check
      _
    $region43: #{decoder_forward.1} parent=1 // pred_check_branch
      %85 = sbr.rel (0) target = $region45
    $region44: #{decoder_forward.1} parent=1 // pred_region
      %87 = dma.done [#allocation9], 1024
    $region45: #{decoder_forward.1} parent=1 // pred_fallthru
      _
    %v89 = vld [vmem:[#allocation2] sm:$0xff]
    %v90 = vpack.c.bf16 %v89, %v89
    %v91 = vld [vmem:[#allocation5] sm:$0xf]
    %v92 = vld [vmem:[#allocation5 + $0x4] sm:$0xf]
    %v93 = vld [vmem:[%s2] sm:$0x1]
    %v95 = vperm.slane %v93, 0
    %v99 = vunpack.c.l.b16 %v91
    %v100 = vunpack.c.l.b16 %v92
    %v101 = vpack.c.b16 %v100, %v99
    %vm103 = vcmask 130048
    %v105 = vsel %vm103, %v90, 0
    %107 = vmatpush.bf16.msra.mxu0 0
    %108 = vmatpush.bf16.msra.mxu0 0
    %109 = vmatpush.bf16.msra.mxu0 0
    %110 = vmatpush.bf16.msra.mxu0 0
    %111 = vmatpush.bf16.msra.mxu0 0
    %112 = vmatpush.bf16.msra.mxu0 0
    %113 = vmatpush.bf16.msra.mxu0 0
    %114 = vmatpush.bf16.msra.mxu0 %v101
    %115 = vmatmul.bf16.gmra.mxu0 %v105
    %v116 = vpop.f32.mrf.mxu0
    %v117 = vadd.f32 %v95, %v116
    %v118 = vpop.f32.mrf.mxu0
    %119 = vdwg.mxu0
    %v120 = vmax.f32 %v117, 0.0
    %v121 = vpack.c.bf16 %v120, %v120
    %v122 = vld [vmem:[#allocation7] sm:$0xf]
    %v123 = vld [vmem:[#allocation7 + $0x4] sm:$0xf]
    %v124 = vld [vmem:[#allocation7 + $0x8] sm:$0xf]
    %v125 = vld [vmem:[#allocation7 + $0xc] sm:$0xf]
    %v126 = vld [vmem:[#allocation7 + $0x10] sm:$0xf]
    %v127 = vld [vmem:[#allocation7 + $0x14] sm:$0xf]
    %v128 = vld [vmem:[#allocation7 + $0x18] sm:$0xf]
    %v129 = vld [vmem:[#allocation7 + $0x1c] sm:$0xf]
    %v130 = vld [vmem:[#allocation7 + $0x20] sm:$0xf]
    %v131 = vld [vmem:[#allocation7 + $0x24] sm:$0xf]
    %v132 = vld [vmem:[#allocation7 + $0x28] sm:$0xf]
    %v133 = vld [vmem:[#allocation7 + $0x2c] sm:$0xf]
    %v134 = vld [vmem:[#allocation7 + $0x30] sm:$0xf]
    %v135 = vld [vmem:[#allocation7 + $0x34] sm:$0xf]
    %v136 = vld [vmem:[#allocation7 + $0x38] sm:$0xf]
    %v137 = vld [vmem:[#allocation7 + $0x3c] sm:$0xf]
    %v138 = vld [vmem:[%s4] sm:$0x1]
    %v140 = vperm.slane %v138, 0
    %v158 = vunpack.c.l.b16 %v122
    %v159 = vunpack.c.l.b16 %v123
    %v160 = vunpack.c.l.b16 %v124
    %v161 = vunpack.c.l.b16 %v125
    %v162 = vunpack.c.l.b16 %v126
    %v163 = vunpack.c.l.b16 %v127
    %v164 = vunpack.c.l.b16 %v128
    %v165 = vunpack.c.l.b16 %v129
    %v166 = vunpack.c.l.b16 %v130
    %v167 = vunpack.c.l.b16 %v131
    %v168 = vunpack.c.l.b16 %v132
    %v169 = vunpack.c.l.b16 %v133
    %v170 = vunpack.c.l.b16 %v134
    %v171 = vunpack.c.l.b16 %v135
    %v172 = vunpack.c.l.b16 %v136
    %v173 = vunpack.c.l.b16 %v137
    %v174 = vpack.c.b16 %v159, %v158
    %v175 = vpack.c.b16 %v161, %v160
    %v176 = vpack.c.b16 %v163, %v162
    %v177 = vpack.c.b16 %v165, %v164
    %v178 = vpack.c.b16 %v167, %v166
    %v179 = vpack.c.b16 %v169, %v168
    %v180 = vpack.c.b16 %v171, %v170
    %v181 = vpack.c.b16 %v173, %v172
    %190 = vmatpush.bf16.msra.mxu0 %v181
    %191 = vmatpush.bf16.msra.mxu0 %v180
    %192 = vmatpush.bf16.msra.mxu0 %v179
    %193 = vmatpush.bf16.msra.mxu0 %v178
    %194 = vmatpush.bf16.msra.mxu0 %v177
    %195 = vmatpush.bf16.msra.mxu0 %v176
    %196 = vmatpush.bf16.msra.mxu0 %v175
    %197 = vmatpush.bf16.msra.mxu0 %v174
    %198 = vmatmul.bf16.gmra.mxu0 %v121
    %v199 = vpop.f32.mrf.mxu0
    %v200 = vadd.f32 %v140, %v199
    %v201 = vpop.f32.mrf.mxu0
    %202 = vdwg.mxu0
    %v203 = vmax.f32 %v200, 0.0
    %v204 = vpack.c.bf16 %v203, %v203
    %v205 = vld [vmem:[#allocation8] sm:$0xf]
    %v206 = vld [vmem:[#allocation8 + $0x4] sm:$0xf]
    %v207 = vld [vmem:[#allocation8 + $0x8] sm:$0xf]
    %v208 = vld [vmem:[#allocation8 + $0xc] sm:$0xf]
    %v209 = vld [vmem:[#allocation8 + $0x10] sm:$0xf]
    %v210 = vld [vmem:[#allocation8 + $0x14] sm:$0xf]
    %v211 = vld [vmem:[#allocation8 + $0x18] sm:$0xf]
    %v212 = vld [vmem:[#allocation8 + $0x1c] sm:$0xf]
    %v213 = vld [vmem:[#allocation8 + $0x20] sm:$0xf]
    %v214 = vld [vmem:[#allocation8 + $0x24] sm:$0xf]
    %v215 = vld [vmem:[#allocation8 + $0x28] sm:$0xf]
    %v216 = vld [vmem:[#allocation8 + $0x2c] sm:$0xf]
    %v217 = vld [vmem:[#allocation8 + $0x30] sm:$0xf]
    %v218 = vld [vmem:[#allocation8 + $0x34] sm:$0xf]
    %v219 = vld [vmem:[#allocation8 + $0x38] sm:$0xf]
    %v220 = vld [vmem:[#allocation8 + $0x3c] sm:$0xf]
    %v221 = vld [vmem:[%s6] sm:$0x1]
    %v223 = vperm.slane %v221, 0
    %v241 = vunpack.c.l.b16 %v205
    %v242 = vunpack.c.l.b16 %v206
    %v243 = vunpack.c.l.b16 %v207
    %v244 = vunpack.c.l.b16 %v208
    %v245 = vunpack.c.l.b16 %v209
    %v246 = vunpack.c.l.b16 %v210
    %v247 = vunpack.c.l.b16 %v211
    %v248 = vunpack.c.l.b16 %v212
    %v249 = vunpack.c.l.b16 %v213
    %v250 = vunpack.c.l.b16 %v214
    %v251 = vunpack.c.l.b16 %v215
    %v252 = vunpack.c.l.b16 %v216
    %v253 = vunpack.c.l.b16 %v217
    %v254 = vunpack.c.l.b16 %v218
    %v255 = vunpack.c.l.b16 %v219
    %v256 = vunpack.c.l.b16 %v220
    %v257 = vpack.c.b16 %v242, %v241
    %v258 = vpack.c.b16 %v244, %v243
    %v259 = vpack.c.b16 %v246, %v245
    %v260 = vpack.c.b16 %v248, %v247
    %v261 = vpack.c.b16 %v250, %v249
    %v262 = vpack.c.b16 %v252, %v251
    %v263 = vpack.c.b16 %v254, %v253
    %v264 = vpack.c.b16 %v256, %v255
    %273 = vmatpush.bf16.msra.mxu0 %v264
    %274 = vmatpush.bf16.msra.mxu0 %v263
    %275 = vmatpush.bf16.msra.mxu0 %v262
    %276 = vmatpush.bf16.msra.mxu0 %v261
    %277 = vmatpush.bf16.msra.mxu0 %v260
    %278 = vmatpush.bf16.msra.mxu0 %v259
    %279 = vmatpush.bf16.msra.mxu0 %v258
    %280 = vmatpush.bf16.msra.mxu0 %v257
    %281 = vmatmul.bf16.gmra.mxu0 %v204
    %v282 = vpop.f32.mrf.mxu0
    %v283 = vadd.f32 %v223, %v282
    %v284 = vpop.f32.mrf.mxu0
    %285 = vdwg.mxu0
    %286 = vst [vmem:[#allocation10] sm:$0xff] %v283
    // Predicated region
    $region46: #{decoder_forward.1} parent=1 // pred_check
      _
    $region47: #{decoder_forward.1} parent=1 // pred_check_branch
      %288 = sbr.rel (0) target = $region49
    $region48: #{decoder_forward.1} parent=1 // pred_region
      %290 = vsyncadd [#allocation4], 0
      %s292 = sshll.u32 [#allocation10], 4
      %s293 = int_to_ptr.vmem [resolvable:$true] %s292
      %s294 = sshll.u32 %s7, 4
      %s295 = int_to_ptr.hbm [resolvable:$true] %s294
      %297 = dma.vmem_to_hbm [thread:$0]  %s293, 128, %s295, [#allocation4]
    $region49: #{decoder_forward.1} parent=1 // pred_fallthru
      _
    // Predicated region
    $region50: #{decoder_forward.1} parent=1 // pred_check
      _
    $region51: #{decoder_forward.1} parent=1 // pred_check_branch
      %299 = sbr.rel (0) target = $region53
    $region52: #{decoder_forward.1} parent=1 // pred_region
      %301 = dma.done [#allocation4], 128
    $region53: #{decoder_forward.1} parent=1 // pred_fallthru
      _
    %302 = vsyncpa [#allocation3], 1
    %303 = vsyncpa [#allocation6], 1
    %304 = vsyncpa [#allocation9], 1
    %305 = vsyncpa [#allocation4], 1

</llo_original>
